<compile_context>
chip_gen: v5e
topology: v5e:2x2
jax: 0.10.0
libtpu: 0.0.40
codegen_flags: <defaults>
</compile_context>

<pallas_src>
from collections import deque
from typing import Optional

import numpy as np
import jax
import jax.numpy as jnp
from jax import lax
from jax.experimental import pallas as pl
from jax.experimental.pallas import tpu as pltpu


NUM_PARAMS = 16       # max_delay
PARAM_SIZE = 256

CHUNK = 128           # step-totals per grid step (one full lane row)
NUM_CHUNKS = 4
WINDOW = CHUNK * NUM_CHUNKS   # steps batched per pallas_call


# ----------------------------------------------------------------------------
# One-time kernel: per-parameter mean(param**2), lane-dense output slab.
# ----------------------------------------------------------------------------
def _losses_kernel(p_ref, out_ref):
    n, d = p_ref.shape
    x = p_ref[...]
    means = jnp.sum(x * x, axis=-1, keepdims=True) * (1.0 / d)   # (N, 1) f32
    out_ref[...] = jnp.broadcast_to(means, out_ref.shape)        # (N, 128)


@jax.jit
def _param_losses(params):
    n, d = params.shape
    out = pl.pallas_call(
        _losses_kernel,
        out_shape=jax.ShapeDtypeStruct((n, 128), jnp.float32),
        in_specs=[pl.BlockSpec(memory_space=pltpu.MemorySpace.VMEM)],
        out_specs=pl.BlockSpec(memory_space=pltpu.MemorySpace.VMEM),
    )(params)
    return out[:, 0]                                             # (N,)


# ----------------------------------------------------------------------------
# Batched kernel: gated totals for WINDOW consecutive steps.
#   p_ref:   (N, D)     f32  params
#   mod_ref: (N, CHUNK) i32  table block: column c -> c % (i+1)
#   res_ref: (N, 1)     i32  (base_step + 1) % (i+1) for this window
#   out_ref: (1, CHUNK) f32  totals for this chunk of steps
# ----------------------------------------------------------------------------
def _totals_kernel(p_ref, mod_ref, res_ref, out_ref):
    n, d = p_ref.shape
    w = mod_ref.shape[1]

    x = p_ref[...]
    means = jnp.sum(x * x, axis=-1, keepdims=True) * (1.0 / d)   # (N, 1) f32

    # step t = base + 1 + c;  t % (i+1) == 0  <=>  (res + tab) in {0, i+1}
    xv = res_ref[...] + mod_ref[...]                             # (N, W) i32
    period = lax.broadcasted_iota(jnp.int32, (n, w), 0) + 1      # (N, W): i+1
    gate = jnp.logical_or(xv == 0, xv == period)

    gated = jnp.where(gate, jnp.broadcast_to(means, (n, w)), 0.0)
    out_ref[...] = jnp.sum(gated, axis=0, keepdims=True) * (1.0 / n)


def _batched_totals(params, mod_table, residues):
    n, d = params.shape
    return pl.pallas_call(
        _totals_kernel,
        out_shape=jax.ShapeDtypeStruct((1, WINDOW), jnp.float32),
        grid_spec=pltpu.PrefetchScalarGridSpec(
            num_scalar_prefetch=0,
            grid=(NUM_CHUNKS,),
            in_specs=[
                pl.BlockSpec((n, d), lambda i: (0, 0)),
                pl.BlockSpec((n, CHUNK), lambda i: (0, i)),
                pl.BlockSpec((n, 1), lambda i: (0, 0)),
            ],
            out_specs=pl.BlockSpec((1, CHUNK), lambda i: (0, i)),
        ),
        compiler_params=pltpu.CompilerParams(
            dimension_semantics=("parallel",)),
    )(params, mod_table, residues)


@jax.jit
def _totals_window(params, mod_table, residues):
    return _batched_totals(params, mod_table, residues)[0]       # (WINDOW,)


# ----------------------------------------------------------------------------
# Python wrapper mirroring the PyTorch module's state and semantics.
# ----------------------------------------------------------------------------
class PallasGradientDelayModel:
    def __init__(self, max_delay: int = 16, param_size: int = 256, seed: int = 0):
        key = jax.random.PRNGKey(seed)
        # Deterministic stand-in for torch.randn(param_size) per parameter.
        self.params = jax.random.normal(
            key, (max_delay, param_size), dtype=jnp.float32
        )
        self.max_delay = max_delay
        self.delays = list(range(max_delay))
        self.step = 0
        self.grad_queues = [deque(maxlen=i + 1) for i in self.delays]

        # Constant per-parameter losses: one device call + one host fetch, ever.
        self._losses_host = np.asarray(jax.device_get(_param_losses(self.params)))

        # Compile-time column-mod table (device-resident, uploaded once).
        self._mod_table = jnp.asarray(
            np.array([[c % (i + 1) for c in range(WINDOW)]
                      for i in range(max_delay)], dtype=np.int32))

        self._window_base = 0
        self._window_vals: Optional[np.ndarray] = None

    def _refill(self, base: int):
        # 16 int32 residues — the only per-window host->device traffic.
        res = np.array([[(base + 1) % (i + 1)] for i in range(self.max_delay)],
                       dtype=np.int32)
        totals = _totals_window(self.params, self._mod_table, jnp.asarray(res))
        self._window_vals = np.asarray(jax.device_get(totals))
        self._window_base = base

    def __call__(self):
        self.step += 1

        # Host-side state fidelity: mirror the reference module's deques.
        for q, lv in zip(self.grad_queues, self._losses_host):
            q.append(float(lv))

        idx = self.step - 1 - self._window_base
        if self._window_vals is None or not (0 <= idx < self._window_vals.shape[0]):
            self._refill(self.step - 1)
            idx = 0
        return self._window_vals[idx]


if __name__ == "__main__":
    model = PallasGradientDelayModel(
        max_delay=NUM_PARAMS, param_size=PARAM_SIZE, seed=0
    )

    # Pure NumPy reference mirroring the PyTorch module exactly.
    params_np = np.asarray(jax.device_get(model.params)).astype(np.float64)
    ref_losses = (params_np ** 2).mean(axis=1)
    ref_queues = [deque(maxlen=i + 1) for i in range(NUM_PARAMS)]

    n_steps = 600   # > WINDOW, so the window-refill path is exercised too
    for t in range(1, n_steps + 1):
        out = jax.block_until_ready(model())
        total = 0.0
        for i in range(NUM_PARAMS):
            ref_queues[i].append(ref_losses[i])
            if len(ref_queues[i]) == ref_queues[i].maxlen and t % (i + 1) == 0:
                total += ref_queues[i][0]
        expected = total / NUM_PARAMS
        assert np.allclose(float(out), expected, rtol=1e-5, atol=1e-6), (
            t, float(out), expected,
        )

    print("KERNEL_OK")
</pallas_src>

<mosaic_0001>
module attributes {stable_mosaic.version = 11 : i64} {
  func.func @_losses_kernel(%arg0: memref<16x256xf32, #tpu.memory_space<vmem>>, %arg1: memref<16x128xf32, #tpu.memory_space<vmem>>) attributes {dimension_semantics = [], scalar_prefetch = 0 : i64, scratch_operands = 0 : i64, tpu.core_type = #tpu.core_type<tc>} {
    %c0 = arith.constant 0 : index
    %c0_0 = arith.constant 0 : index
    %0 = vector.load %arg0[%c0, %c0_0] : memref<16x256xf32, #tpu.memory_space<vmem>>, vector<16x256xf32>
    %1 = arith.mulf %0, %0 : vector<16x256xf32>
    %cst = arith.constant dense<0.000000e+00> : vector<16xf32>
    %2 = vector.multi_reduction <add>, %1, %cst [1] : vector<16x256xf32> to vector<16xf32>
    %3 = vector.shape_cast %2 : vector<16xf32> to vector<16x1xf32>
    %cst_1 = arith.constant 3.906250e-03 : f32
    %4 = vector.broadcast %cst_1 : f32 to vector<16x1xf32>
    %5 = arith.mulf %3, %4 : vector<16x1xf32>
    %6 = vector.shape_cast %5 : vector<16x1xf32> to vector<16x1xf32>
    %7 = vector.broadcast %6 : vector<16x1xf32> to vector<16x128xf32>
    %c0_2 = arith.constant 0 : index
    %c0_3 = arith.constant 0 : index
    %8 = vector.load %arg1[%c0_2, %c0_3] : memref<16x128xf32, #tpu.memory_space<vmem>>, vector<16x128xf32>
    tpu.vector_store %arg1[%c0_2, %c0_3], %7 {strides = array<i32>} : memref<16x128xf32, #tpu.memory_space<vmem>>, vector<16x128xf32>,
    return
  }
}

</mosaic_0001>

<llo_original>
// kernel: _param_losses.1
$region0: #{_param_losses.1}
  #allocation0 [shape = 'u32[]', space=smem, size = 0x4, offset = 0x4, fixed_abs, tag = 'smem constant byte address 0x4 - core index']
  #allocation1 [shape = 'u32[72,128]{1,0:T(1,128)}', space=vmem, size = 0x9000, scoped, tag = 'internal scratch']
  %s0 = inlined_call_operand.hbm [shape: f32[16,256], index: 0, kind: input, shape index: {}]
  %s1 = inlined_call_operand.vmem [shape: f32[16,128], index: 1, kind: output, shape index: {}]
  %s2 = sld [smem:[#allocation0]]
  $region18: #{_param_losses.1} parent=0
    _
  %s4 = ssub.s32 1, %s2
  %s5 = scalar_select 0, %s4, %s2
  $region1: #{_param_losses.1} parent=0
    #allocation2 [shape = 'u8[16384]{0}', space=vmem, size = 0x4000, scoped, tag = 'input window, operand 0, single buffered']
    #allocation3 [shape = 's32[1]{0}', space=sflag, size = 0x4, scoped, tag = 'scoped memory for _param_losses.1']
    %6 = vsyncpa [#allocation3], 0
    // Predicated region
    $region2: #{_param_losses.1} parent=1 // pred_check
      _
    $region3: #{_param_losses.1} parent=1 // pred_check_branch
      %8 = sbr.rel (0) target = $region5
    $region4: #{_param_losses.1} parent=1 // pred_region
      %10 = vsyncadd [#allocation3], 0
      %s11 = sshll.u32 %s0, 4
      %s12 = int_to_ptr.hbm [resolvable:$true] %s11
      %s13 = sshll.u32 [#allocation2], 4
      %s14 = int_to_ptr.vmem [resolvable:$true] %s13
      %19 = dma.hbm_to_vmem [thread:$0]  %s12, 512, %s14, [#allocation3], 256, 256, 16
    $region5: #{_param_losses.1} parent=1 // pred_fallthru
      _
    // Predicated region
    $region6: #{_param_losses.1} parent=1 // pred_check
      _
    $region7: #{_param_losses.1} parent=1 // pred_check_branch
      %21 = sbr.rel (0) target = $region9
    $region8: #{_param_losses.1} parent=1 // pred_region
      %23 = dma.done [#allocation3], 512
    $region9: #{_param_losses.1} parent=1 // pred_fallthru
      _
    %v24 = vld [vmem:[#allocation2] sm:$0xff]
    %v25 = vld [vmem:[#allocation2 + $0x8] sm:$0xff]
    %v26 = vld [vmem:[#allocation2 + $0x10] sm:$0xff]
    %v27 = vld [vmem:[#allocation2 + $0x18] sm:$0xff]
    %v28 = vmul.f32 %v24, %v24
    %v29 = vmul.f32 %v25, %v25
    %v30 = vmul.f32 %v26, %v26
    %v31 = vmul.f32 %v27, %v27
    %v32 = vadd.f32 %v28, %v29
    %33 = vadd.xlane.f32.xlu0 %v32
    %v34 = vpop.xlane.xlu0 %33
    %v35 = vadd.f32 %v30, %v31
    %36 = vadd.xlane.f32.xlu0 %v35
    %v37 = vpop.xlane.xlu0 %36
    %v38 = vmul.f32 %v34, 0.00390625
    %v39 = vmul.f32 %v37, 0.00390625
    %40 = vst [vmem:[%s1] sm:$0xff] %v38
    %41 = vst [vmem:[%s1 + $0x8] sm:$0xff] %v39
    // Predicated region
    $region10: #{_param_losses.1} parent=1 // pred_check
      _
    $region11: #{_param_losses.1} parent=1 // pred_check_branch
      %43 = sbr.rel (0) target = $region13
    $region12: #{_param_losses.1} parent=1 // pred_region
      _
    $region13: #{_param_losses.1} parent=1 // pred_fallthru
      _
    // Predicated region
    $region14: #{_param_losses.1} parent=1 // pred_check
      _
    $region15: #{_param_losses.1} parent=1 // pred_check_branch
      %45 = sbr.rel (0) target = $region17
    $region16: #{_param_losses.1} parent=1 // pred_region
      _
    $region17: #{_param_losses.1} parent=1 // pred_fallthru
      _
    %46 = vsyncpa [#allocation3], 1

</llo_original>
